<compile_context>
chip_gen: v5e
topology: v5e:2x2
jax: 0.10.0
libtpu: 0.0.40
codegen_flags: <defaults>
</compile_context>

<pallas_src>
import functools

import jax
import jax.numpy as jnp
from jax import lax
from jax.experimental import pallas as pl
from jax.experimental.pallas import tpu as pltpu


def _round_up(x, m):
    return ((x + m - 1) // m) * m


def _fcca_kernel(x_ref, w1_ref, b1_ref, w2_ref, b2_ref, w3_ref, b3_ref, o_ref):
    # x_ref: [TB, in_dim]  batch-major tile straight from HBM (no host transpose).
    x = x_ref[...]
    # Layer 1: contract the feature dim of both operands -> feature-major
    # [hidden, TB] so the batch sits on the 128-lane axis for everything below.
    h1 = lax.dot_general(
        w1_ref[...], x, (((1,), (1,)), ((), ())),
        preferred_element_type=jnp.float32,
    ) + b1_ref[...]
    h1 = jnp.maximum(h1, 0.0)
    # Layer 2: Linear(32, 32) + ReLU -> [hidden, TB]
    h2 = jnp.dot(w2_ref[...], h1, preferred_element_type=jnp.float32) + b2_ref[...]
    h2 = jnp.maximum(h2, 0.0)
    # Output layer: Linear(32, out_dim) -> [out_dim, TB], lane-dense store.
    o_ref[...] = (
        jnp.dot(w3_ref[...], h2, preferred_element_type=jnp.float32) + b3_ref[...]
    ).astype(o_ref.dtype)


@functools.partial(jax.jit, static_argnames=("block_b", "feature_major_out"))
def fcca_forward(states, params, *, block_b=32768, feature_major_out=False):
    """Fused forward pass of FCCA.

    states: [B, input_dim] float32 (batch-major, unpadded)
    params: PyTorch-layout dict: w1 [32,in], b1 [32,1], w2 [32,32], b2 [32,1],
            w3 [out,32], b3 [out,1]
    returns logits: [B, output_dim] (or [output_dim, B] if feature_major_out).
    """
    B, in_dim = states.shape
    hidden = params["w1"].shape[0]
    out_dim = params["w3"].shape[0]

    # Batch tile: lane-dense multiple of 128.  Cap so that (a) large batches
    # yield >= 2 grid steps (v7x megacore), (b) VMEM stays bounded everywhere.
    tb = max(128, min(block_b, _round_up(pl.cdiv(B, 2), 128)))
    grid = (pl.cdiv(B, tb),)  # ragged tail block handled by Pallas masking

    const = lambda i: (0, 0)  # weights / biases stay VMEM-resident across steps
    out_t = pl.pallas_call(
        _fcca_kernel,
        out_shape=jax.ShapeDtypeStruct((out_dim, B), jnp.float32),
        grid=grid,
        in_specs=[
            pl.BlockSpec((tb, in_dim), lambda i: (i, 0)),      # states tile (batch-major)
            pl.BlockSpec((hidden, in_dim), const),             # w1
            pl.BlockSpec((hidden, 1), const),                  # b1
            pl.BlockSpec((hidden, hidden), const),             # w2
            pl.BlockSpec((hidden, 1), const),                  # b2
            pl.BlockSpec((out_dim, hidden), const),            # w3
            pl.BlockSpec((out_dim, 1), const),                 # b3
        ],
        out_specs=pl.BlockSpec((out_dim, tb), lambda i: (0, i)),
        compiler_params=pltpu.CompilerParams(
            dimension_semantics=("parallel",),
            vmem_limit_bytes=32 * 1024 * 1024,  # big tiles also fit v5e's scoped VMEM
        ),
    )(
        states,
        params["w1"], params["b1"],
        params["w2"], params["b2"],
        params["w3"], params["b3"],
    )
    if feature_major_out:
        return out_t            # [out_dim, B]: skip the transpose pass entirely
    return out_t.T              # [B, out_dim], matches the PyTorch forward


def init_fcca_params(key, input_dim, output_dim, hidden=32):
    """PyTorch nn.Linear default init: uniform(-1/sqrt(fan_in), 1/sqrt(fan_in)).
    Weights kept in PyTorch layout [out, in]; biases as [out, 1]."""
    def linear(k, fan_in, fan_out):
        kw, kb = jax.random.split(k)
        bound = 1.0 / jnp.sqrt(jnp.float32(fan_in))
        w = jax.random.uniform(kw, (fan_out, fan_in), jnp.float32, -bound, bound)
        b = jax.random.uniform(kb, (fan_out, 1), jnp.float32, -bound, bound)
        return w, b

    k1, k2, k3 = jax.random.split(key, 3)
    w1, b1 = linear(k1, input_dim, hidden)
    w2, b2 = linear(k2, hidden, hidden)
    w3, b3 = linear(k3, hidden, output_dim)
    return {"w1": w1, "b1": b1, "w2": w2, "b2": b2, "w3": w3, "b3": b3}


def fcca_reference(states, p):
    h1 = jnp.maximum(states @ p["w1"].T + p["b1"].T, 0.0)
    h2 = jnp.maximum(h1 @ p["w2"].T + p["b2"].T, 0.0)
    return h2 @ p["w3"].T + p["b3"].T


if __name__ == "__main__":
    # CartPole-like dims: observation dim 4, action dim 2, small batch of 8.
    input_dim, output_dim, batch = 4, 2, 8

    key = jax.random.PRNGKey(0)
    k_params, k_states = jax.random.split(key)
    params = init_fcca_params(k_params, input_dim, output_dim)
    states = jax.random.normal(k_states, (batch, input_dim), dtype=jnp.float32)

    logits = jax.block_until_ready(fcca_forward(states, params))
    ref = fcca_reference(states, params)
    assert logits.shape == (batch, output_dim)
    assert jnp.allclose(logits, ref, atol=1e-5, rtol=1e-5)

    # feature-major output path (skips the post-kernel transpose)
    logits_fm = jax.block_until_ready(
        fcca_forward(states, params, feature_major_out=True))
    assert logits_fm.shape == (output_dim, batch)
    assert jnp.allclose(logits_fm.T, ref, atol=1e-5, rtol=1e-5)

    # ragged batch (not a multiple of the tile) + multi-step grid
    states2 = jax.random.normal(jax.random.PRNGKey(1), (300, input_dim), jnp.float32)
    logits2 = jax.block_until_ready(fcca_forward(states2, params, block_b=128))
    assert logits2.shape == (300, output_dim)
    assert jnp.allclose(logits2, fcca_reference(states2, params), atol=1e-5, rtol=1e-5)

    print("KERNEL_OK")
</pallas_src>

<mosaic_0001>
module attributes {stable_mosaic.version = 11 : i64} {
  func.func @_fcca_kernel(%arg0: i32, %arg1: memref<128x4xf32, #tpu.memory_space<vmem>>, %arg2: memref<32x4xf32, #tpu.memory_space<vmem>>, %arg3: memref<32x1xf32, #tpu.memory_space<vmem>>, %arg4: memref<32x32xf32, #tpu.memory_space<vmem>>, %arg5: memref<32x1xf32, #tpu.memory_space<vmem>>, %arg6: memref<2x32xf32, #tpu.memory_space<vmem>>, %arg7: memref<2x1xf32, #tpu.memory_space<vmem>>, %arg8: memref<2x128xf32, #tpu.memory_space<vmem>>) attributes {dimension_semantics = [#tpu.dimension_semantics<parallel>], iteration_bounds = array<i64: 1>, scalar_prefetch = 0 : i64, scratch_operands = 0 : i64, tpu.core_type = #tpu.core_type<tc>, window_params = [{transform_indices = @transform_0, window_bounds = array<i64: 128, 4>}, {pipeline_mode = #tpu.pipeline_mode<synchronous>, transform_indices = @transform_1, window_bounds = array<i64: 32, 4>}, {pipeline_mode = #tpu.pipeline_mode<synchronous>, transform_indices = @transform_2, window_bounds = array<i64: 32, 1>}, {pipeline_mode = #tpu.pipeline_mode<synchronous>, transform_indices = @transform_3, window_bounds = array<i64: 32, 32>}, {pipeline_mode = #tpu.pipeline_mode<synchronous>, transform_indices = @transform_4, window_bounds = array<i64: 32, 1>}, {pipeline_mode = #tpu.pipeline_mode<synchronous>, transform_indices = @transform_5, window_bounds = array<i64: 2, 32>}, {pipeline_mode = #tpu.pipeline_mode<synchronous>, transform_indices = @transform_6, window_bounds = array<i64: 2, 1>}, {transform_indices = @transform_7, window_bounds = array<i64: 2, 128>}]} {
    %c0 = arith.constant 0 : index
    %c0_0 = arith.constant 0 : index
    %0 = vector.load %arg1[%c0, %c0_0] : memref<128x4xf32, #tpu.memory_space<vmem>>, vector<128x4xf32>
    %c0_1 = arith.constant 0 : index
    %c0_2 = arith.constant 0 : index
    %1 = vector.load %arg2[%c0_1, %c0_2] : memref<32x4xf32, #tpu.memory_space<vmem>>, vector<32x4xf32>
    %cst = arith.constant dense<0.000000e+00> : vector<32x128xf32>
    %2 = tpu.matmul %1, %0, %cst {dimension_numbers = #tpu.dot_dimension_numbers<[1], [1], [0], [0], [0, 0, 1, 0], [], []>} : vector<32x4xf32>, vector<128x4xf32>, vector<32x128xf32> -> vector<32x128xf32>
    %c0_3 = arith.constant 0 : index
    %c0_4 = arith.constant 0 : index
    %3 = vector.load %arg3[%c0_3, %c0_4] : memref<32x1xf32, #tpu.memory_space<vmem>>, vector<32x1xf32>
    %4 = vector.broadcast %3 : vector<32x1xf32> to vector<32x128xf32>
    %5 = arith.addf %2, %4 : vector<32x128xf32>
    %cst_5 = arith.constant 0.000000e+00 : f32
    %6 = vector.broadcast %cst_5 : f32 to vector<32x128xf32>
    %7 = arith.maximumf %5, %6 : vector<32x128xf32>
    %c0_6 = arith.constant 0 : index
    %c0_7 = arith.constant 0 : index
    %8 = vector.load %arg4[%c0_6, %c0_7] : memref<32x32xf32, #tpu.memory_space<vmem>>, vector<32x32xf32>
    %cst_8 = arith.constant dense<0.000000e+00> : vector<32x128xf32>
    %9 = tpu.matmul %8, %7, %cst_8 {dimension_numbers = #tpu.dot_dimension_numbers<[1], [0], [0], [1], [0, 0, 1, 1], [], []>} : vector<32x32xf32>, vector<32x128xf32>, vector<32x128xf32> -> vector<32x128xf32>
    %c0_9 = arith.constant 0 : index
    %c0_10 = arith.constant 0 : index
    %10 = vector.load %arg5[%c0_9, %c0_10] : memref<32x1xf32, #tpu.memory_space<vmem>>, vector<32x1xf32>
    %11 = vector.broadcast %10 : vector<32x1xf32> to vector<32x128xf32>
    %12 = arith.addf %9, %11 : vector<32x128xf32>
    %cst_11 = arith.constant 0.000000e+00 : f32
    %13 = vector.broadcast %cst_11 : f32 to vector<32x128xf32>
    %14 = arith.maximumf %12, %13 : vector<32x128xf32>
    %c0_12 = arith.constant 0 : index
    %c0_13 = arith.constant 0 : index
    %15 = vector.load %arg6[%c0_12, %c0_13] : memref<2x32xf32, #tpu.memory_space<vmem>>, vector<2x32xf32>
    %cst_14 = arith.constant dense<0.000000e+00> : vector<2x128xf32>
    %16 = tpu.matmul %15, %14, %cst_14 {dimension_numbers = #tpu.dot_dimension_numbers<[1], [0], [0], [1], [0, 0, 1, 1], [], []>} : vector<2x32xf32>, vector<32x128xf32>, vector<2x128xf32> -> vector<2x128xf32>
    %c0_15 = arith.constant 0 : index
    %c0_16 = arith.constant 0 : index
    %17 = vector.load %arg7[%c0_15, %c0_16] : memref<2x1xf32, #tpu.memory_space<vmem>>, vector<2x1xf32>
    %18 = vector.broadcast %17 : vector<2x1xf32> to vector<2x128xf32>
    %19 = arith.addf %16, %18 : vector<2x128xf32>
    %c0_17 = arith.constant 0 : index
    %c0_18 = arith.constant 0 : index
    %20 = vector.load %arg8[%c0_17, %c0_18] : memref<2x128xf32, #tpu.memory_space<vmem>>, vector<2x128xf32>
    tpu.vector_store %arg8[%c0_17, %c0_18], %19 {strides = array<i32>} : memref<2x128xf32, #tpu.memory_space<vmem>>, vector<2x128xf32>,
    return
  }
  func.func @transform_0(%arg0: i32) -> (i32, i32) {
    %c0_i32 = arith.constant 0 : i32
    %c0_i32_0 = arith.constant 0 : i32
    return %arg0, %c0_i32 : i32, i32
  }
  func.func @transform_1(%arg0: i32) -> (i32, i32) {
    %c0_i32 = arith.constant 0 : i32
    %c0_i32_0 = arith.constant 0 : i32
    %c0_i32_1 = arith.constant 0 : i32
    return %c0_i32, %c0_i32_0 : i32, i32
  }
  func.func @transform_2(%arg0: i32) -> (i32, i32) {
    %c0_i32 = arith.constant 0 : i32
    %c0_i32_0 = arith.constant 0 : i32
    %c0_i32_1 = arith.constant 0 : i32
    return %c0_i32, %c0_i32_0 : i32, i32
  }
  func.func @transform_3(%arg0: i32) -> (i32, i32) {
    %c0_i32 = arith.constant 0 : i32
    %c0_i32_0 = arith.constant 0 : i32
    %c0_i32_1 = arith.constant 0 : i32
    return %c0_i32, %c0_i32_0 : i32, i32
  }
  func.func @transform_4(%arg0: i32) -> (i32, i32) {
    %c0_i32 = arith.constant 0 : i32
    %c0_i32_0 = arith.constant 0 : i32
    %c0_i32_1 = arith.constant 0 : i32
    return %c0_i32, %c0_i32_0 : i32, i32
  }
  func.func @transform_5(%arg0: i32) -> (i32, i32) {
    %c0_i32 = arith.constant 0 : i32
    %c0_i32_0 = arith.constant 0 : i32
    %c0_i32_1 = arith.constant 0 : i32
    return %c0_i32, %c0_i32_0 : i32, i32
  }
  func.func @transform_6(%arg0: i32) -> (i32, i32) {
    %c0_i32 = arith.constant 0 : i32
    %c0_i32_0 = arith.constant 0 : i32
    %c0_i32_1 = arith.constant 0 : i32
    return %c0_i32, %c0_i32_0 : i32, i32
  }
  func.func @transform_7(%arg0: i32) -> (i32, i32) {
    %c0_i32 = arith.constant 0 : i32
    %c0_i32_0 = arith.constant 0 : i32
    return %c0_i32, %arg0 : i32, i32
  }
}

</mosaic_0001>

<llo_original>
// kernel: fcca_forward.1
$region0: #{fcca_forward.1}
  #allocation0 [shape = 'u32[]', space=smem, size = 0x4, offset = 0x4, fixed_abs, tag = 'smem constant byte address 0x4 - core index']
  #allocation1 [shape = 'u32[72,128]{1,0:T(1,128)}', space=vmem, size = 0x9000, scoped, tag = 'internal scratch']
  %s0 = inlined_call_operand.vmem [shape: f32[8,4], index: 0, kind: input, shape index: {}]
  %s1 = inlined_call_operand.vmem [shape: f32[32,4], index: 1, kind: input, shape index: {}]
  %s2 = inlined_call_operand.vmem [shape: f32[32,1], index: 2, kind: input, shape index: {}]
  %s3 = inlined_call_operand.vmem [shape: f32[32,32], index: 3, kind: input, shape index: {}]
  %s4 = inlined_call_operand.vmem [shape: f32[32,1], index: 4, kind: input, shape index: {}]
  %s5 = inlined_call_operand.vmem [shape: f32[2,32], index: 5, kind: input, shape index: {}]
  %s6 = inlined_call_operand.vmem [shape: f32[2,1], index: 6, kind: input, shape index: {}]
  %s7 = inlined_call_operand.hbm [shape: f32[2,8], index: 7, kind: output, shape index: {}]
  %s8 = sld [smem:[#allocation0]]
  $region38: #{fcca_forward.1} parent=0
    _
  %s10 = ssub.s32 1, %s8
  %s11 = scalar_select 0, %s10, %s8
  $region1: #{fcca_forward.1} parent=0
    #allocation2 [shape = 'u8[1024]{0}', space=vmem, size = 0x400, scoped, tag = 'output window, operand 0, single buffered']
    #allocation3 [shape = 's32[1]{0}', space=sflag, size = 0x4, scoped, tag = 'scoped memory for fcca_forward.1']
    %12 = vsyncpa [#allocation3], 0
    // Predicated region
    $region2: #{fcca_forward.1} parent=1 // pred_check
      _
    $region3: #{fcca_forward.1} parent=1 // pred_check_branch
      %14 = sbr.rel (0) target = $region5
    $region4: #{fcca_forward.1} parent=1 // pred_region
      _
    $region5: #{fcca_forward.1} parent=1 // pred_fallthru
      _
    // Predicated region
    $region6: #{fcca_forward.1} parent=1 // pred_check
      _
    $region7: #{fcca_forward.1} parent=1 // pred_check_branch
      %16 = sbr.rel (0) target = $region9
    $region8: #{fcca_forward.1} parent=1 // pred_region
      _
    $region9: #{fcca_forward.1} parent=1 // pred_fallthru
      _
    // Predicated region
    $region10: #{fcca_forward.1} parent=1 // pred_check
      _
    $region11: #{fcca_forward.1} parent=1 // pred_check_branch
      %18 = sbr.rel (0) target = $region13
    $region12: #{fcca_forward.1} parent=1 // pred_region
      _
    $region13: #{fcca_forward.1} parent=1 // pred_fallthru
      _
    // Predicated region
    $region14: #{fcca_forward.1} parent=1 // pred_check
      _
    $region15: #{fcca_forward.1} parent=1 // pred_check_branch
      %20 = sbr.rel (0) target = $region17
    $region16: #{fcca_forward.1} parent=1 // pred_region
      _
    $region17: #{fcca_forward.1} parent=1 // pred_fallthru
      _
    // Predicated region
    $region18: #{fcca_forward.1} parent=1 // pred_check
      _
    $region19: #{fcca_forward.1} parent=1 // pred_check_branch
      %22 = sbr.rel (0) target = $region21
    $region20: #{fcca_forward.1} parent=1 // pred_region
      _
    $region21: #{fcca_forward.1} parent=1 // pred_fallthru
      _
    // Predicated region
    $region22: #{fcca_forward.1} parent=1 // pred_check
      _
    $region23: #{fcca_forward.1} parent=1 // pred_check_branch
      %24 = sbr.rel (0) target = $region25
    $region24: #{fcca_forward.1} parent=1 // pred_region
      _
    $region25: #{fcca_forward.1} parent=1 // pred_fallthru
      _
    // Predicated region
    $region26: #{fcca_forward.1} parent=1 // pred_check
      _
    $region27: #{fcca_forward.1} parent=1 // pred_check_branch
      %26 = sbr.rel (0) target = $region29
    $region28: #{fcca_forward.1} parent=1 // pred_region
      _
    $region29: #{fcca_forward.1} parent=1 // pred_fallthru
      _
    %v27 = vld [vmem:[%s0] sm:$0xff]
    %v28 = vld [vmem:[%s0 + $0x8] sm:$0xff]
    %v29 = vld [vmem:[%s0 + $0x10] sm:$0xff]
    %v30 = vld [vmem:[%s0 + $0x18] sm:$0xff]
    %v31 = vld [vmem:[%s0 + $0x20] sm:$0xff]
    %v32 = vld [vmem:[%s0 + $0x28] sm:$0xff]
    %v33 = vld [vmem:[%s0 + $0x30] sm:$0xff]
    %v34 = vld [vmem:[%s0 + $0x38] sm:$0xff]
    %v35 = vld [vmem:[%s0 + $0x40] sm:$0xff]
    %v36 = vld [vmem:[%s0 + $0x48] sm:$0xff]
    %v37 = vld [vmem:[%s0 + $0x50] sm:$0xff]
    %v38 = vld [vmem:[%s0 + $0x58] sm:$0xff]
    %v39 = vld [vmem:[%s0 + $0x60] sm:$0xff]
    %v40 = vld [vmem:[%s0 + $0x68] sm:$0xff]
    %v41 = vld [vmem:[%s0 + $0x70] sm:$0xff]
    %v42 = vld [vmem:[%s0 + $0x78] sm:$0xff]
    %v43 = vld [vmem:[%s1] sm:$0xff]
    %v44 = vld [vmem:[%s1 + $0x8] sm:$0xff]
    %v45 = vld [vmem:[%s1 + $0x10] sm:$0xff]
    %v46 = vld [vmem:[%s1 + $0x18] sm:$0xff]
    %v47 = vld [vmem:[%s2] sm:$0xff]
    %v48 = vld [vmem:[%s2 + $0x8] sm:$0xff]
    %v49 = vld [vmem:[%s2 + $0x10] sm:$0xff]
    %v50 = vld [vmem:[%s2 + $0x18] sm:$0xff]
    %52 = vset.pattern.permute.xlu0 0
    %53 = vperm.xlu0 %52, %v47
    %v54 = vpop.permute.xlu0 %53
    %57 = vset.pattern.permute.xlu0 0
    %58 = vperm.xlu0 %57, %v48
    %v59 = vpop.permute.xlu0 %58
    %62 = vset.pattern.permute.xlu0 0
    %63 = vperm.xlu0 %62, %v49
    %v64 = vpop.permute.xlu0 %63
    %67 = vset.pattern.permute.xlu0 0
    %68 = vperm.xlu0 %67, %v50
    %v69 = vpop.permute.xlu0 %68
    %vm71 = vcmask 31744
    %v73 = vsel %vm71, %v43, 0
    %v76 = vsel %vm71, %v44, 0
    %v79 = vsel %vm71, %v45, 0
    %v82 = vsel %vm71, %v46, 0
    %v85 = vsel %vm71, %v27, 0
    %v88 = vsel %vm71, %v28, 0
    %v91 = vsel %vm71, %v29, 0
    %v94 = vsel %vm71, %v30, 0
    %v97 = vsel %vm71, %v31, 0
    %v100 = vsel %vm71, %v32, 0
    %v103 = vsel %vm71, %v33, 0
    %v106 = vsel %vm71, %v34, 0
    %v109 = vsel %vm71, %v35, 0
    %v112 = vsel %vm71, %v36, 0
    %v115 = vsel %vm71, %v37, 0
    %v118 = vsel %vm71, %v38, 0
    %v121 = vsel %vm71, %v39, 0
    %v124 = vsel %vm71, %v40, 0
    %v127 = vsel %vm71, %v41, 0
    %v130 = vsel %vm71, %v42, 0
    %132 = vmatpush.xpose.msra.mxu0 %v130
    %133 = vmatpush.xpose.msra.mxu0 %v127
    %134 = vmatpush.xpose.msra.mxu0 %v124
    %135 = vmatpush.xpose.msra.mxu0 %v121
    %136 = vmatpush.xpose.msra.mxu0 %v118
    %137 = vmatpush.xpose.msra.mxu0 %v115
    %138 = vmatpush.xpose.msra.mxu0 %v112
    %139 = vmatpush.xpose.msra.mxu0 %v109
    %140 = vmatpush.xpose.msra.mxu0 %v106
    %141 = vmatpush.xpose.msra.mxu0 %v103
    %142 = vmatpush.xpose.msra.mxu0 %v100
    %143 = vmatpush.xpose.msra.mxu0 %v97
    %144 = vmatpush.xpose.msra.mxu0 %v94
    %145 = vmatpush.xpose.msra.mxu0 %v91
    %146 = vmatpush.xpose.msra.mxu0 %v88
    %147 = vmatpush.xpose.msra.mxu0 %v85
    %148 = vmatmul.f32.gmra.mxu0 %v73
    %v149 = vpop.f32.mrf.mxu0
    %v150 = vadd.f32 %v54, %v149
    %151 = vmatmul.f32.gmra.mxu0 %v76
    %v152 = vpop.f32.mrf.mxu0
    %v153 = vadd.f32 %v59, %v152
    %154 = vmatmul.f32.gmra.mxu0 %v79
    %v155 = vpop.f32.mrf.mxu0
    %v156 = vadd.f32 %v64, %v155
    %157 = vmatmul.f32.gmra.mxu0 %v82
    %v158 = vpop.f32.mrf.mxu0
    %v159 = vadd.f32 %v69, %v158
    %160 = vdwg.mxu0
    %v161 = vmax.f32 %v150, 0.0
    %v162 = vmax.f32 %v153, 0.0
    %v163 = vmax.f32 %v156, 0.0
    %v164 = vmax.f32 %v159, 0.0
    %v165 = vld [vmem:[%s3] sm:$0xff]
    %v166 = vld [vmem:[%s3 + $0x8] sm:$0xff]
    %v167 = vld [vmem:[%s3 + $0x10] sm:$0xff]
    %v168 = vld [vmem:[%s3 + $0x18] sm:$0xff]
    %v169 = vld [vmem:[%s4] sm:$0xff]
    %v170 = vld [vmem:[%s4 + $0x8] sm:$0xff]
    %v171 = vld [vmem:[%s4 + $0x10] sm:$0xff]
    %v172 = vld [vmem:[%s4 + $0x18] sm:$0xff]
    %174 = vset.pattern.permute.xlu0 0
    %175 = vperm.xlu0 %174, %v169
    %v176 = vpop.permute.xlu0 %175
    %179 = vset.pattern.permute.xlu0 0
    %180 = vperm.xlu0 %179, %v170
    %v181 = vpop.permute.xlu0 %180
    %184 = vset.pattern.permute.xlu0 0
    %185 = vperm.xlu0 %184, %v171
    %v186 = vpop.permute.xlu0 %185
    %189 = vset.pattern.permute.xlu0 0
    %190 = vperm.xlu0 %189, %v172
    %v191 = vpop.permute.xlu0 %190
    %vm193 = vcmask 261120
    %v195 = vsel %vm193, %v165, 0
    %v198 = vsel %vm193, %v166, 0
    %v201 = vsel %vm193, %v167, 0
    %v204 = vsel %vm193, %v168, 0
    %206 = vmatpush.msra.mxu0 0.0
    %207 = vmatpush.msra.mxu0 0.0
    %208 = vmatpush.msra.mxu0 0.0
    %209 = vmatpush.msra.mxu0 0.0
    %210 = vmatpush.msra.mxu0 0.0
    %211 = vmatpush.msra.mxu0 0.0
    %212 = vmatpush.msra.mxu0 0.0
    %213 = vmatpush.msra.mxu0 0.0
    %214 = vmatpush.msra.mxu0 0.0
    %215 = vmatpush.msra.mxu0 0.0
    %216 = vmatpush.msra.mxu0 0.0
    %217 = vmatpush.msra.mxu0 0.0
    %218 = vmatpush.msra.mxu0 %v164
    %219 = vmatpush.msra.mxu0 %v163
    %220 = vmatpush.msra.mxu0 %v162
    %221 = vmatpush.msra.mxu0 %v161
    %222 = vmatmul.f32.gmra.mxu0 %v195
    %v223 = vpop.f32.mrf.mxu0
    %v224 = vadd.f32 %v176, %v223
    %225 = vmatmul.f32.gmra.mxu0 %v198
    %v226 = vpop.f32.mrf.mxu0
    %v227 = vadd.f32 %v181, %v226
    %228 = vmatmul.f32.gmra.mxu0 %v201
    %v229 = vpop.f32.mrf.mxu0
    %v230 = vadd.f32 %v186, %v229
    %231 = vmatmul.f32.gmra.mxu0 %v204
    %v232 = vpop.f32.mrf.mxu0
    %v233 = vadd.f32 %v191, %v232
    %234 = vdwg.mxu0
    %v235 = vmax.f32 %v224, 0.0
    %v236 = vmax.f32 %v227, 0.0
    %v237 = vmax.f32 %v230, 0.0
    %v238 = vmax.f32 %v233, 0.0
    %v239 = vld [vmem:[%s5] sm:$0x3]
    %v240 = vld [vmem:[%s6] sm:$0x3]
    %242 = vset.pattern.permute.xlu0 0
    %243 = vperm.xlu0 %242, %v240
    %v244 = vpop.permute.xlu0 %243
    %v247 = vsel %vm193, %v239, 0
    %249 = vmatpush.msra.mxu0 0.0
    %250 = vmatpush.msra.mxu0 0.0
    %251 = vmatpush.msra.mxu0 0.0
    %252 = vmatpush.msra.mxu0 0.0
    %253 = vmatpush.msra.mxu0 0.0
    %254 = vmatpush.msra.mxu0 0.0
    %255 = vmatpush.msra.mxu0 0.0
    %256 = vmatpush.msra.mxu0 0.0
    %257 = vmatpush.msra.mxu0 0.0
    %258 = vmatpush.msra.mxu0 0.0
    %259 = vmatpush.msra.mxu0 0.0
    %260 = vmatpush.msra.mxu0 0.0
    %261 = vmatpush.msra.mxu0 %v238
    %262 = vmatpush.msra.mxu0 %v237
    %263 = vmatpush.msra.mxu0 %v236
    %264 = vmatpush.msra.mxu0 %v235
    %265 = vmatmul.f32.gmra.mxu0 %v247
    %v266 = vpop.f32.mrf.mxu0
    %v267 = vadd.f32 %v244, %v266
    %268 = vdwg.mxu0
    %269 = vst [vmem:[#allocation2] sm:$0x3] %v267
    // Predicated region
    $region30: #{fcca_forward.1} parent=1 // pred_check
      _
    $region31: #{fcca_forward.1} parent=1 // pred_check_branch
      %271 = sbr.rel (0) target = $region33
    $region32: #{fcca_forward.1} parent=1 // pred_region
      %273 = vsyncadd [#allocation3], 0
      %s275 = sshll.u32 [#allocation2], 4
      %s276 = int_to_ptr.vmem [resolvable:$true] %s275
      %s277 = sshll.u32 %s7, 4
      %s278 = int_to_ptr.hbm [resolvable:$true] %s277
      %280 = dma.vmem_to_hbm [thread:$0]  %s276, 32, %s278, [#allocation3]
    $region33: #{fcca_forward.1} parent=1 // pred_fallthru
      _
    // Predicated region
    $region34: #{fcca_forward.1} parent=1 // pred_check
      _
    $region35: #{fcca_forward.1} parent=1 // pred_check_branch
      %282 = sbr.rel (0) target = $region37
    $region36: #{fcca_forward.1} parent=1 // pred_region
      %284 = dma.done [#allocation3], 32
    $region37: #{fcca_forward.1} parent=1 // pred_fallthru
      _
    %285 = vsyncpa [#allocation3], 1

</llo_original>
